<compile_context>
chip_gen: v7x
topology: tpu7x:2x2x1
jax: 0.10.0
libtpu: 0.0.40
codegen_flags: <defaults>
</compile_context>

<pallas_src>
import jax
import jax.numpy as jnp
from jax.experimental import pallas as pl
from jax.experimental.pallas import tpu as pltpu


def _loglog_kernel_factory(scale_min, scale_max, exp_min, exp_max):
    def kernel(scale_ref, exp_ref, x_ref, o_ref):
        # Clamp the tiny (tc, 1) parameter columns once per tile (VPU).
        s = jnp.clip(scale_ref[...], scale_min, scale_max)   # (tc, 1)
        e = jnp.clip(exp_ref[...], exp_min, exp_max)         # (tc, 1)
        x = x_ref[...]                                       # (tc, tn)
        # Positive-domain pow: exp(e * log(x)).
        # x == 0 -> exp(e * -inf) = 0 (correct because exp_min > 0).
        # NOTE: negative x yields NaN, same as torch.pow for fractional
        # exponents; log-log fitting assumes a positive domain.
        o_ref[...] = s * jnp.exp(e * jnp.log(x))
    return kernel


def _pick_tiles(C, N, itemsize, tile_budget_bytes, tn_max, tc_max):
    """Pick (tc, tn) so the x tile is ~tile_budget_bytes, widening tn first.

    tn: full N if it fits (block == full dim is always legal), else a
        lane-dense multiple of 128.
    tc: the rest of the byte budget, sublane-aligned (multiple of 8) unless it
        covers the full C dimension.
    """
    assert tn_max % 128 == 0 and tc_max % 8 == 0
    tn = N if N <= tn_max else tn_max
    row_bytes = tn * itemsize
    tc_budget = max(8, tile_budget_bytes // row_bytes)
    if C <= tc_budget:
        tc = C                                   # full dim: always legal
    else:
        tc = max(8, min(tc_max, (tc_budget // 8) * 8))
    return tc, tn


def loglog_forward(x, scaling, exponent,
                   scale_min=-4.0, scale_max=4.0, exp_min=0.1, exp_max=1.0,
                   tile_budget_bytes=4 << 20, tn_max=8192, tc_max=512):
    """x: (C, N) float32; scaling, exponent: (C, 1) float32."""
    # Guard the implicit assumption that makes x == 0 well-defined
    # (exp_min > 0 -> 0**e == 0, matching torch.pow for positive exponents).
    assert exp_min > 0.0, "exp_min must be > 0 for the exp(e*log(x)) lowering"

    C, N = x.shape
    itemsize = jnp.dtype(x.dtype).itemsize
    tc, tn = _pick_tiles(C, N, itemsize, tile_budget_bytes, tn_max, tc_max)
    grid = (pl.cdiv(C, tc), pl.cdiv(N, tn))

    # Double-buffered x tile + out tile (+ slack for params / edge padding).
    tile_bytes = tc * tn * itemsize
    vmem_limit = int(min(max(4 * tile_bytes + (2 << 20), 32 << 20), 48 << 20))

    kernel = _loglog_kernel_factory(scale_min, scale_max, exp_min, exp_max)
    return pl.pallas_call(
        kernel,
        out_shape=jax.ShapeDtypeStruct((C, N), x.dtype),
        grid=grid,
        in_specs=[
            # Params: tiled only along C; block index constant along the N
            # axis so they stay resident across the inner N loop.
            pl.BlockSpec((tc, 1), lambda i, j: (i, 0)),   # scaling
            pl.BlockSpec((tc, 1), lambda i, j: (i, 0)),   # exponent
            pl.BlockSpec((tc, tn), lambda i, j: (i, j)),  # x
        ],
        out_specs=pl.BlockSpec((tc, tn), lambda i, j: (i, j)),
        compiler_params=pltpu.CompilerParams(
            dimension_semantics=("parallel", "parallel"),
            vmem_limit_bytes=vmem_limit),
    )(scaling, exponent, x)


if __name__ == "__main__":
    # Small deterministic example consistent with the module's (C, N) layout.
    num_curves = 16
    num_points = 1024

    key = jax.random.PRNGKey(0)
    kx, ks, ke = jax.random.split(key, 3)

    # nn.Parameter init is ones; perturb deterministically to exercise clamps.
    scaling = jax.random.uniform(ks, (num_curves, 1), jnp.float32, -6.0, 6.0)
    exponent = jax.random.uniform(ke, (num_curves, 1), jnp.float32, 0.0, 1.5)

    # Positive inputs typical of the log-log curve-fitting domain.
    x = jax.random.uniform(kx, (num_curves, num_points),
                           dtype=jnp.float32, minval=0.1, maxval=10.0)

    ref = (jnp.clip(scaling, -4.0, 4.0)
           * jnp.power(x, jnp.clip(exponent, 0.1, 1.0)))

    # 1) Default (budget-driven) tiling: whole problem fits one tile here;
    #    at real problem sizes this produces ~4 MiB lane-dense tiles.
    out = loglog_forward(x, scaling, exponent)
    out = jax.block_until_ready(out)
    assert out.shape == (num_curves, num_points)
    assert jnp.allclose(out, ref, rtol=1e-4, atol=1e-5), \
        float(jnp.max(jnp.abs(out - ref)))

    # 2) Forced small tiles to exercise the multi-tile grid + pipelining path
    #    (grid = (1, 4) with tn = 256 on this shape).
    out_tiled = loglog_forward(x, scaling, exponent,
                               tile_budget_bytes=64 << 10,
                               tn_max=256, tc_max=8)
    out_tiled = jax.block_until_ready(out_tiled)
    assert jnp.allclose(out_tiled, ref, rtol=1e-4, atol=1e-5), \
        float(jnp.max(jnp.abs(out_tiled - ref)))

    print("KERNEL_OK")
</pallas_src>

<mosaic_0001>
module attributes {stable_mosaic.version = 11 : i64} {
  func.func @kernel(%arg0: i32, %arg1: i32, %arg2: memref<16x1xf32, #tpu.memory_space<vmem>>, %arg3: memref<16x1xf32, #tpu.memory_space<vmem>>, %arg4: memref<16x1024xf32, #tpu.memory_space<vmem>>, %arg5: memref<16x1024xf32, #tpu.memory_space<vmem>>) attributes {dimension_semantics = [#tpu.dimension_semantics<parallel>, #tpu.dimension_semantics<parallel>], iteration_bounds = array<i64: 1, 1>, scalar_prefetch = 0 : i64, scratch_operands = 0 : i64, tpu.core_type = #tpu.core_type<tc>, window_params = [{transform_indices = @transform_0, window_bounds = array<i64: 16, 1>}, {transform_indices = @transform_1, window_bounds = array<i64: 16, 1>}, {transform_indices = @transform_2, window_bounds = array<i64: 16, 1024>}, {transform_indices = @transform_3, window_bounds = array<i64: 16, 1024>}]} {
    %c0 = arith.constant 0 : index
    %c0_0 = arith.constant 0 : index
    %0 = vector.load %arg2[%c0, %c0_0] : memref<16x1xf32, #tpu.memory_space<vmem>>, vector<16x1xf32>
    %cst = arith.constant -4.000000e+00 : f32
    %cst_1 = arith.constant 4.000000e+00 : f32
    %1 = vector.broadcast %cst : f32 to vector<16x1xf32>
    %2 = arith.maximumf %1, %0 : vector<16x1xf32>
    %3 = vector.broadcast %cst_1 : f32 to vector<16x1xf32>
    %4 = arith.minimumf %3, %2 : vector<16x1xf32>
    %c0_2 = arith.constant 0 : index
    %c0_3 = arith.constant 0 : index
    %5 = vector.load %arg3[%c0_2, %c0_3] : memref<16x1xf32, #tpu.memory_space<vmem>>, vector<16x1xf32>
    %cst_4 = arith.constant 1.000000e-01 : f32
    %cst_5 = arith.constant 1.000000e+00 : f32
    %6 = vector.broadcast %cst_4 : f32 to vector<16x1xf32>
    %7 = arith.maximumf %6, %5 : vector<16x1xf32>
    %8 = vector.broadcast %cst_5 : f32 to vector<16x1xf32>
    %9 = arith.minimumf %8, %7 : vector<16x1xf32>
    %c0_6 = arith.constant 0 : index
    %c0_7 = arith.constant 0 : index
    %10 = vector.load %arg4[%c0_6, %c0_7] : memref<16x1024xf32, #tpu.memory_space<vmem>>, vector<16x1024xf32>
    %11 = math.log %10 : vector<16x1024xf32>
    %12 = vector.broadcast %9 : vector<16x1xf32> to vector<16x1024xf32>
    %13 = arith.mulf %12, %11 : vector<16x1024xf32>
    %14 = math.exp %13 : vector<16x1024xf32>
    %15 = vector.broadcast %4 : vector<16x1xf32> to vector<16x1024xf32>
    %16 = arith.mulf %15, %14 : vector<16x1024xf32>
    %c0_8 = arith.constant 0 : index
    %c0_9 = arith.constant 0 : index
    %17 = vector.load %arg5[%c0_8, %c0_9] : memref<16x1024xf32, #tpu.memory_space<vmem>>, vector<16x1024xf32>
    tpu.vector_store %arg5[%c0_8, %c0_9], %16 {strides = array<i32>} : memref<16x1024xf32, #tpu.memory_space<vmem>>, vector<16x1024xf32>,
    return
  }
  func.func @transform_0(%arg0: i32, %arg1: i32) -> (i32, i32) {
    %c0_i32 = arith.constant 0 : i32
    %c0_i32_0 = arith.constant 0 : i32
    return %arg0, %c0_i32 : i32, i32
  }
  func.func @transform_1(%arg0: i32, %arg1: i32) -> (i32, i32) {
    %c0_i32 = arith.constant 0 : i32
    %c0_i32_0 = arith.constant 0 : i32
    return %arg0, %c0_i32 : i32, i32
  }
  func.func @transform_2(%arg0: i32, %arg1: i32) -> (i32, i32) {
    %c0_i32 = arith.constant 0 : i32
    return %arg0, %arg1 : i32, i32
  }
  func.func @transform_3(%arg0: i32, %arg1: i32) -> (i32, i32) {
    %c0_i32 = arith.constant 0 : i32
    return %arg0, %arg1 : i32, i32
  }
}

</mosaic_0001>

<llo_original>
// kernel: tpu_custom_call.1
$region0: #{tpu_custom_call.1}
  #allocation0 [shape = 'u32[]', space=smem, size = 0x4, offset = 0x4, fixed_abs, tag = 'smem constant byte address 0x4 - core index']
  #allocation1 [shape = 'u32[144,128]{1,0:T(1,128)}', space=vmem, size = 0x12000, scoped, tag = 'internal scratch']
  %s0 = inlined_call_operand.vmem [shape: f32[16,1], index: 0, kind: input, shape index: {}]
  %s1 = inlined_call_operand.vmem [shape: f32[16,1], index: 1, kind: input, shape index: {}]
  %s2 = inlined_call_operand.hbm [shape: f32[16,1024], index: 2, kind: input, shape index: {}]
  %s3 = inlined_call_operand.hbm [shape: f32[16,1024], index: 3, kind: output, shape index: {}]
  %s4 = sld [smem:[#allocation0]]
  $region26: #{tpu_custom_call.1} parent=0
    _
  %s6 = ssub.s32 1, %s4
  %s7 = scalar_select 0, %s6, %s4
  $region1: #{tpu_custom_call.1} parent=0
    #allocation2 [shape = 'u8[65536]{0}', space=vmem, size = 0x10000, scoped, tag = 'input window, operand 2, single buffered']
    #allocation3 [shape = 's32[1]{0}', space=sflag, size = 0x4, scoped, tag = 'scoped memory for tpu_custom_call.1']
    #allocation4 [shape = 's32[1]{0}', space=sflag, size = 0x4, scoped, tag = 'scoped memory for tpu_custom_call.1']
    #allocation5 [shape = 'u8[65536]{0}', space=vmem, size = 0x10000, scoped, tag = 'output window, operand 0, single buffered']
    %8 = vsyncpa [#allocation3], 0
    %9 = vsyncpa [#allocation4], 0
    // Predicated region
    $region2: #{tpu_custom_call.1} parent=1 // pred_check
      _
    $region3: #{tpu_custom_call.1} parent=1 // pred_check_branch
      %11 = sbr.rel (0) target = $region5
    $region4: #{tpu_custom_call.1} parent=1 // pred_region
      _
    $region5: #{tpu_custom_call.1} parent=1 // pred_fallthru
      _
    // Predicated region
    $region6: #{tpu_custom_call.1} parent=1 // pred_check
      _
    $region7: #{tpu_custom_call.1} parent=1 // pred_check_branch
      %13 = sbr.rel (0) target = $region9
    $region8: #{tpu_custom_call.1} parent=1 // pred_region
      _
    $region9: #{tpu_custom_call.1} parent=1 // pred_fallthru
      _
    // Predicated region
    $region10: #{tpu_custom_call.1} parent=1 // pred_check
      _
    $region11: #{tpu_custom_call.1} parent=1 // pred_check_branch
      %15 = sbr.rel (0) target = $region13
    $region12: #{tpu_custom_call.1} parent=1 // pred_region
      %s17 = ssub.s32 2048, 2048
      %18 = vsyncadd [#allocation3], %s17
      %s19 = sshll.u32 [#allocation2], 4
      %s20 = int_to_ptr.vmem [resolvable:$true] %s19
      %25 = dma.hbm_to_vmem [thread:$0]  %s2, 2048, %s20, [#allocation3], 1024, 1024, 64
    $region13: #{tpu_custom_call.1} parent=1 // pred_fallthru
      _
    // Predicated region
    $region14: #{tpu_custom_call.1} parent=1 // pred_check
      _
    $region15: #{tpu_custom_call.1} parent=1 // pred_check_branch
      %27 = sbr.rel (0) target = $region17
    $region16: #{tpu_custom_call.1} parent=1 // pred_region
      %28 = dma.done [#allocation3], 2048
    $region17: #{tpu_custom_call.1} parent=1 // pred_fallthru
      _
    %v29 = vld [vmem:[%s0] sm:$0xff]
    %v30 = vld [vmem:[%s0 + $0x8] sm:$0xff]
    %v31 = vmax.f32 %v29, -4.0
    %v32 = vmax.f32 %v30, -4.0
    %v33 = vmin.f32 %v31, 4.0
    %v34 = vmin.f32 %v32, 4.0
    %v35 = vld [vmem:[%s1] sm:$0xff]
    %v36 = vld [vmem:[%s1 + $0x8] sm:$0xff]
    %v37 = vmax.f32 %v35, 0.1
    %v38 = vmax.f32 %v36, 0.1
    %v39 = vmin.f32 %v37, 1.0
    %v40 = vmin.f32 %v38, 1.0
    %v41 = vld [vmem:[#allocation2] sm:$0xff]
    %v42 = vld [vmem:[#allocation2 + $0x8] sm:$0xff]
    %v43 = vld [vmem:[#allocation2 + $0x10] sm:$0xff]
    %v44 = vld [vmem:[#allocation2 + $0x18] sm:$0xff]
    %v45 = vld [vmem:[#allocation2 + $0x20] sm:$0xff]
    %v46 = vld [vmem:[#allocation2 + $0x28] sm:$0xff]
    %v47 = vld [vmem:[#allocation2 + $0x30] sm:$0xff]
    %v48 = vld [vmem:[#allocation2 + $0x38] sm:$0xff]
    %v49 = vld [vmem:[#allocation2 + $0x40] sm:$0xff]
    %v50 = vld [vmem:[#allocation2 + $0x48] sm:$0xff]
    %v51 = vld [vmem:[#allocation2 + $0x50] sm:$0xff]
    %v52 = vld [vmem:[#allocation2 + $0x58] sm:$0xff]
    %v53 = vld [vmem:[#allocation2 + $0x60] sm:$0xff]
    %v54 = vld [vmem:[#allocation2 + $0x68] sm:$0xff]
    %v55 = vld [vmem:[#allocation2 + $0x70] sm:$0xff]
    %v56 = vld [vmem:[#allocation2 + $0x78] sm:$0xff]
    %v57 = vlog2.pop %v41
    %v58 = vmul.f32 %v57, 0.6931472
    %v59 = vlog2.pop %v42
    %v60 = vmul.f32 %v59, 0.6931472
    %v61 = vlog2.pop %v43
    %v62 = vmul.f32 %v61, 0.6931472
    %v63 = vlog2.pop %v44
    %v64 = vmul.f32 %v63, 0.6931472
    %v65 = vlog2.pop %v45
    %v66 = vmul.f32 %v65, 0.6931472
    %v67 = vlog2.pop %v46
    %v68 = vmul.f32 %v67, 0.6931472
    %v69 = vlog2.pop %v47
    %v70 = vmul.f32 %v69, 0.6931472
    %v71 = vlog2.pop %v48
    %v72 = vmul.f32 %v71, 0.6931472
    %v73 = vlog2.pop %v49
    %v74 = vmul.f32 %v73, 0.6931472
    %v75 = vlog2.pop %v50
    %v76 = vmul.f32 %v75, 0.6931472
    %v77 = vlog2.pop %v51
    %v78 = vmul.f32 %v77, 0.6931472
    %v79 = vlog2.pop %v52
    %v80 = vmul.f32 %v79, 0.6931472
    %v81 = vlog2.pop %v53
    %v82 = vmul.f32 %v81, 0.6931472
    %v83 = vlog2.pop %v54
    %v84 = vmul.f32 %v83, 0.6931472
    %v85 = vlog2.pop %v55
    %v86 = vmul.f32 %v85, 0.6931472
    %v87 = vlog2.pop %v56
    %v88 = vmul.f32 %v87, 0.6931472
    %90 = vset.pattern.permute.xlu0 0
    %91 = vperm.xlu0 %90, %v39
    %v92 = vpop.permute.xlu0 %91
    %95 = vset.pattern.permute.xlu0 0
    %96 = vperm.xlu0 %95, %v40
    %v97 = vpop.permute.xlu0 %96
    %v99 = vmul.f32 %v92, %v58
    %v100 = vmul.f32 %v92, %v60
    %v101 = vmul.f32 %v92, %v62
    %v102 = vmul.f32 %v92, %v64
    %v103 = vmul.f32 %v92, %v66
    %v104 = vmul.f32 %v92, %v68
    %v105 = vmul.f32 %v92, %v70
    %v106 = vmul.f32 %v92, %v72
    %v107 = vmul.f32 %v97, %v74
    %v108 = vmul.f32 %v97, %v76
    %v109 = vmul.f32 %v97, %v78
    %v110 = vmul.f32 %v97, %v80
    %v111 = vmul.f32 %v97, %v82
    %v112 = vmul.f32 %v97, %v84
    %v113 = vmul.f32 %v97, %v86
    %v114 = vmul.f32 %v97, %v88
    %v115 = vmul.f32 %v99, 1.442695
    %v116 = vpow.pop %v115
    %v117 = vmul.f32 %v100, 1.442695
    %v118 = vpow.pop %v117
    %v119 = vmul.f32 %v101, 1.442695
    %v120 = vpow.pop %v119
    %v121 = vmul.f32 %v102, 1.442695
    %v122 = vpow.pop %v121
    %v123 = vmul.f32 %v103, 1.442695
    %v124 = vpow.pop %v123
    %v125 = vmul.f32 %v104, 1.442695
    %v126 = vpow.pop %v125
    %v127 = vmul.f32 %v105, 1.442695
    %v128 = vpow.pop %v127
    %v129 = vmul.f32 %v106, 1.442695
    %v130 = vpow.pop %v129
    %v131 = vmul.f32 %v107, 1.442695
    %v132 = vpow.pop %v131
    %v133 = vmul.f32 %v108, 1.442695
    %v134 = vpow.pop %v133
    %v135 = vmul.f32 %v109, 1.442695
    %v136 = vpow.pop %v135
    %v137 = vmul.f32 %v110, 1.442695
    %v138 = vpow.pop %v137
    %v139 = vmul.f32 %v111, 1.442695
    %v140 = vpow.pop %v139
    %v141 = vmul.f32 %v112, 1.442695
    %v142 = vpow.pop %v141
    %v143 = vmul.f32 %v113, 1.442695
    %v144 = vpow.pop %v143
    %v145 = vmul.f32 %v114, 1.442695
    %v146 = vpow.pop %v145
    %148 = vset.pattern.permute.xlu0 0
    %149 = vperm.xlu0 %148, %v33
    %v150 = vpop.permute.xlu0 %149
    %153 = vset.pattern.permute.xlu0 0
    %154 = vperm.xlu0 %153, %v34
    %v155 = vpop.permute.xlu0 %154
    %v157 = vmul.f32 %v150, %v116
    %v158 = vmul.f32 %v150, %v118
    %v159 = vmul.f32 %v150, %v120
    %v160 = vmul.f32 %v150, %v122
    %v161 = vmul.f32 %v150, %v124
    %v162 = vmul.f32 %v150, %v126
    %v163 = vmul.f32 %v150, %v128
    %v164 = vmul.f32 %v150, %v130
    %v165 = vmul.f32 %v155, %v132
    %v166 = vmul.f32 %v155, %v134
    %v167 = vmul.f32 %v155, %v136
    %v168 = vmul.f32 %v155, %v138
    %v169 = vmul.f32 %v155, %v140
    %v170 = vmul.f32 %v155, %v142
    %v171 = vmul.f32 %v155, %v144
    %v172 = vmul.f32 %v155, %v146
    %173 = vst [vmem:[#allocation5] sm:$0xff] %v157
    %174 = vst [vmem:[#allocation5 + $0x8] sm:$0xff] %v158
    %175 = vst [vmem:[#allocation5 + $0x10] sm:$0xff] %v159
    %176 = vst [vmem:[#allocation5 + $0x18] sm:$0xff] %v160
    %177 = vst [vmem:[#allocation5 + $0x20] sm:$0xff] %v161
    %178 = vst [vmem:[#allocation5 + $0x28] sm:$0xff] %v162
    %179 = vst [vmem:[#allocation5 + $0x30] sm:$0xff] %v163
    %180 = vst [vmem:[#allocation5 + $0x38] sm:$0xff] %v164
    %181 = vst [vmem:[#allocation5 + $0x40] sm:$0xff] %v165
    %182 = vst [vmem:[#allocation5 + $0x48] sm:$0xff] %v166
    %183 = vst [vmem:[#allocation5 + $0x50] sm:$0xff] %v167
    %184 = vst [vmem:[#allocation5 + $0x58] sm:$0xff] %v168
    %185 = vst [vmem:[#allocation5 + $0x60] sm:$0xff] %v169
    %186 = vst [vmem:[#allocation5 + $0x68] sm:$0xff] %v170
    %187 = vst [vmem:[#allocation5 + $0x70] sm:$0xff] %v171
    %188 = vst [vmem:[#allocation5 + $0x78] sm:$0xff] %v172
    // Predicated region
    $region18: #{tpu_custom_call.1} parent=1 // pred_check
      _
    $region19: #{tpu_custom_call.1} parent=1 // pred_check_branch
      %190 = sbr.rel (0) target = $region21
    $region20: #{tpu_custom_call.1} parent=1 // pred_region
      %s192 = ssub.s32 2048, 2048
      %193 = vsyncadd [#allocation4], %s192
      %s194 = sshll.u32 [#allocation5], 4
      %s195 = int_to_ptr.vmem [resolvable:$true] %s194
      %200 = dma.vmem_to_hbm [thread:$0]  %s195, 2048, %s3, [#allocation4], 1024, 1024, 64
    $region21: #{tpu_custom_call.1} parent=1 // pred_fallthru
      _
    // Predicated region
    $region22: #{tpu_custom_call.1} parent=1 // pred_check
      _
    $region23: #{tpu_custom_call.1} parent=1 // pred_check_branch
      %202 = sbr.rel (0) target = $region25
    $region24: #{tpu_custom_call.1} parent=1 // pred_region
      %203 = dma.done [#allocation4], 2048
    $region25: #{tpu_custom_call.1} parent=1 // pred_fallthru
      _
    %204 = vsyncpa [#allocation3], 1
    %205 = vsyncpa [#allocation4], 1

</llo_original>
